<compile_context>
chip_gen: v7x
topology: tpu7x:2x2x1
jax: 0.10.0
libtpu: 0.0.40
codegen_flags: <defaults>
</compile_context>

<pallas_src>
import functools

import jax
import jax.numpy as jnp
from jax.experimental import pallas as pl
from jax.experimental.pallas import tpu as pltpu


def _round_up(x: int, m: int) -> int:
    return ((x + m - 1) // m) * m


def _pick_tile(dim: int, max_tile: int, align: int):
    """dim is a multiple of `align`. Return (tile, padded_dim) with padded_dim % tile == 0.

    Prefers exact divisors of `dim` (zero padding); falls back to modest (<= ~12.5%)
    padding only when exact division would force a tiny tile.
    """
    cap = max(align, min((max_tile // align) * align, dim))
    best = align
    for t in range(cap, align - 1, -align):
        if dim % t == 0:
            best = t
            break
    if best >= max(cap // 2, align):
        return best, dim
    padded = _round_up(dim, cap)
    if padded - dim <= max(dim // 8, align):
        return cap, padded
    return best, dim


def _masked_matmul_kernel(x_ref, w_ref, o_ref, wm_ref, *, latent_dim, layer_width):
    """One (tm, tn) output tile: o = x_tile @ mask(w_tile).

    Grid is (N tiles, M tiles) with N outermost; the masked weight for the current N tile
    is built once (inner index == 0) into the VMEM scratch `wm_ref` and reused across the
    whole batch (M) sweep.
    """
    j = pl.program_id(0)                      # N-tile index (outer, parallel)
    lk, tn = w_ref.shape                      # static block shape (L_pad, tn)

    @pl.when(pl.program_id(1) == 0)           # first batch tile for this N tile
    def _():
        row = jax.lax.broadcasted_iota(jnp.int32, (lk, tn), 0)
        col = jax.lax.broadcasted_iota(jnp.int32, (lk, tn), 1) + j * tn
        # mask[i, c] = 1  iff  i * layer_width <= c * (latent_dim - 1)   (pure int compare)
        keep = (row * layer_width) <= (col * (latent_dim - 1))
        keep = jnp.logical_and(keep, col < layer_width)   # zero padded columns explicitly
        wm_ref[...] = jnp.where(keep, w_ref[...], 0).astype(wm_ref.dtype)

    o_ref[...] = jnp.dot(
        x_ref[...], wm_ref[...], preferred_element_type=jnp.float32
    ).astype(o_ref.dtype)


def first_layer_mask_forward(x, weight, *, compute_dtype=None, out_dtype=None,
                             max_tm=512, max_tn=2048):
    """x: (B, latent_dim), weight: (latent_dim, layer_width) -> (B, layer_width).

    compute_dtype: dtype fed to the MXU (e.g. jnp.bfloat16); accumulation is always f32.
    out_dtype: output dtype (defaults to x.dtype); bf16 halves output HBM traffic.
    """
    B, L = x.shape
    L_w, W = weight.shape
    assert L == L_w, "x and weight latent_dim mismatch"
    if compute_dtype is None:
        compute_dtype = x.dtype
    if out_dtype is None:
        out_dtype = x.dtype

    itemsize = jnp.dtype(compute_dtype).itemsize
    sublane = 8 * max(1, 4 // itemsize)        # 8 for f32, 16 for bf16, 32 for int8/fp8
    L_pad = _round_up(L, sublane)
    B8 = _round_up(B, 8)
    W128 = _round_up(W, 128)

    tm, B_pad = _pick_tile(B8, max_tm, 8)
    tn, W_pad = _pick_tile(W128, max_tn, 128)

    # Guarantee >= 2 tiles on the parallel (N) axis when possible so both v7x TensorCores
    # get work; costs at most one extra ~0.35us grid step on single-TC parts.
    if W_pad // tn == 1 and W_pad >= 256:
        start = (W_pad // 2) - ((W_pad // 2) % 128)
        for t in range(start, 127, -128):
            if W_pad % t == 0:
                tn = t
                break

    # int32 overflow guard for the in-kernel mask arithmetic.
    assert (L_pad - 1) * W < 2 ** 31, "mask arithmetic would overflow int32 (row side)"
    assert (W_pad - 1) * max(L - 1, 1) < 2 ** 31, "mask arithmetic would overflow int32 (col side)"

    # Cast / pad only when needed (pads are to hardware minimums, not tile size).
    x_p = x if x.dtype == jnp.dtype(compute_dtype) else x.astype(compute_dtype)
    w_p = weight if weight.dtype == jnp.dtype(compute_dtype) else weight.astype(compute_dtype)
    if (B_pad, L_pad) != (B, L):
        x_p = jnp.pad(x_p, ((0, B_pad - B), (0, L_pad - L)))
    if (L_pad, W_pad) != (L, W):
        w_p = jnp.pad(w_p, ((0, L_pad - L), (0, W_pad - W)))

    grid = (W_pad // tn, B_pad // tm)          # N tiles outer, M tiles inner

    out_itemsize = jnp.dtype(out_dtype).itemsize
    vmem_est = (2 * tm * tn * out_itemsize     # double-buffered output tile
                + 2 * tm * L_pad * itemsize    # double-buffered x tile
                + 2 * L_pad * tn * itemsize    # double-buffered weight tile
                + L_pad * tn * itemsize)       # masked-weight scratch
    vmem_limit = int(min(max(2 * vmem_est + (8 << 20), 32 << 20), 64 << 20))

    kernel = functools.partial(_masked_matmul_kernel, latent_dim=L, layer_width=W)

    out = pl.pallas_call(
        kernel,
        out_shape=jax.ShapeDtypeStruct((B_pad, W_pad), out_dtype),
        grid=grid,
        in_specs=[
            pl.BlockSpec((tm, L_pad), lambda j, i: (i, 0)),   # x row-block (changes per i)
            pl.BlockSpec((L_pad, tn), lambda j, i: (0, j)),   # weight col-block (constant over i)
        ],
        out_specs=pl.BlockSpec((tm, tn), lambda j, i: (i, j)),
        scratch_shapes=[pltpu.VMEM((L_pad, tn), compute_dtype)],   # masked weight cache
        compiler_params=pltpu.CompilerParams(
            dimension_semantics=("parallel", "arbitrary"),
            vmem_limit_bytes=vmem_limit,
        ),
    )(x_p, w_p)

    if (B_pad, W_pad) != (B, W):
        out = out[:B, :W]
    return out


def make_weight(latent_dim, layer_width, key):
    # kaiming_normal_: fan_in = layer_width, gain = sqrt(2) -> std = sqrt(2 / fan_in)
    std = jnp.sqrt(2.0 / layer_width)
    return std * jax.random.normal(key, (latent_dim, layer_width), dtype=jnp.float32)


def make_mask(latent_dim, layer_width, dtype=jnp.float32):
    # Reference mask (exact integer form of the PyTorch construction).
    rows = jnp.arange(latent_dim)[:, None]
    cols = jnp.arange(layer_width)[None, :]
    return (rows * layer_width <= cols * (latent_dim - 1)).astype(dtype)


if __name__ == "__main__":
    key = jax.random.PRNGKey(0)
    k_w1, k_x1, k_w2, k_x2, k_w3, k_x3 = jax.random.split(key, 6)

    # --- Test 1: small module-typical shapes, f32 path, single-tile grid ---
    latent_dim, layer_width, batch = 8, 32, 16
    weight = make_weight(latent_dim, layer_width, k_w1)
    mask = make_mask(latent_dim, layer_width)
    x = jax.random.normal(k_x1, (batch, latent_dim), dtype=jnp.float32)

    out = jax.block_until_ready(first_layer_mask_forward(x, weight))
    ref = x @ (weight * mask)
    assert out.shape == (batch, layer_width)
    assert jnp.allclose(out, ref, atol=1e-5, rtol=1e-5), "f32 mismatch vs reference"

    # --- Test 2: larger shapes, bf16 MXU compute + bf16 output, multi-tile parallel N ---
    latent_dim2, layer_width2, batch2 = 16, 1024, 512
    weight2 = make_weight(latent_dim2, layer_width2, k_w2)
    mask2 = make_mask(latent_dim2, layer_width2)
    x2 = jax.random.normal(k_x2, (batch2, latent_dim2), dtype=jnp.float32)

    out2 = jax.block_until_ready(
        first_layer_mask_forward(
            x2, weight2, compute_dtype=jnp.bfloat16, out_dtype=jnp.bfloat16
        )
    )
    ref2 = x2 @ (weight2 * mask2)
    assert out2.shape == (batch2, layer_width2)
    assert out2.dtype == jnp.bfloat16
    assert jnp.allclose(out2.astype(jnp.float32), ref2, atol=3e-2, rtol=3e-2), \
        "bf16 mismatch vs reference"

    # --- Test 3: odd, non-aligned shapes (exercises (8,128) padding + col < W guard) ---
    latent_dim3, layer_width3, batch3 = 5, 200, 37
    weight3 = make_weight(latent_dim3, layer_width3, k_w3)
    mask3 = make_mask(latent_dim3, layer_width3)
    x3 = jax.random.normal(k_x3, (batch3, latent_dim3), dtype=jnp.float32)

    out3 = jax.block_until_ready(first_layer_mask_forward(x3, weight3))
    ref3 = x3 @ (weight3 * mask3)
    assert out3.shape == (batch3, layer_width3)
    assert jnp.allclose(out3, ref3, atol=1e-5, rtol=1e-5), "odd-shape mismatch vs reference"

    print("KERNEL_OK")
</pallas_src>

<mosaic_0001>
module attributes {stable_mosaic.version = 11 : i64} {
  func.func @_masked_matmul_kernel(%arg0: i32, %arg1: i32, %arg2: memref<16x8xf32, #tpu.memory_space<vmem>>, %arg3: memref<8x128xf32, #tpu.memory_space<vmem>>, %arg4: memref<16x128xf32, #tpu.memory_space<vmem>>, %arg5: memref<8x128xf32, #tpu.memory_space<vmem>>) attributes {dimension_semantics = [#tpu.dimension_semantics<parallel>, #tpu.dimension_semantics<arbitrary>], iteration_bounds = array<i64: 1, 1>, scalar_prefetch = 0 : i64, scratch_operands = 1 : i64, tpu.core_type = #tpu.core_type<tc>, window_params = [{transform_indices = @transform_0, window_bounds = array<i64: 16, 8>}, {transform_indices = @transform_1, window_bounds = array<i64: 8, 128>}, {transform_indices = @transform_2, window_bounds = array<i64: 16, 128>}]} {
    %c0_i32 = arith.constant 0 : i32
    %0 = arith.cmpi eq, %arg1, %c0_i32 : i32
    %1 = arith.extui %0 : i1 to i32
    %c0_i32_0 = arith.constant 0 : i32
    %2 = arith.cmpi ne, %1, %c0_i32_0 : i32
    scf.if %2 {
      %7 = tpu.iota {dimensions = array<i32: 0>} : vector<8x128xi32>
      %8 = tpu.iota {dimensions = array<i32: 1>} : vector<8x128xi32>
      %c128_i32 = arith.constant 128 : i32
      %9 = arith.muli %arg0, %c128_i32 : i32
      %10 = vector.broadcast %9 : i32 to vector<8x128xi32>
      %11 = arith.addi %8, %10 : vector<8x128xi32>
      %c32_i32 = arith.constant 32 : i32
      %12 = vector.broadcast %c32_i32 : i32 to vector<8x128xi32>
      %13 = arith.muli %7, %12 : vector<8x128xi32>
      %c7_i32 = arith.constant 7 : i32
      %14 = vector.broadcast %c7_i32 : i32 to vector<8x128xi32>
      %15 = arith.muli %11, %14 : vector<8x128xi32>
      %16 = arith.cmpi sle, %13, %15 : vector<8x128xi32>
      %c32_i32_6 = arith.constant 32 : i32
      %17 = vector.broadcast %c32_i32_6 : i32 to vector<8x128xi32>
      %18 = arith.cmpi slt, %11, %17 : vector<8x128xi32>
      %19 = arith.andi %16, %18 : vector<8x128xi1>
      %c0_7 = arith.constant 0 : index
      %c0_8 = arith.constant 0 : index
      %20 = vector.load %arg3[%c0_7, %c0_8] : memref<8x128xf32, #tpu.memory_space<vmem>>, vector<8x128xf32>
      %c0_i32_9 = arith.constant 0 : i32
      %21 = arith.sitofp %c0_i32_9 : i32 to f32
      %22 = vector.broadcast %21 : f32 to vector<8x128xf32>
      %23 = arith.select %19, %20, %22 : vector<8x128xi1>, vector<8x128xf32>
      %c0_10 = arith.constant 0 : index
      %c0_11 = arith.constant 0 : index
      %24 = vector.load %arg5[%c0_10, %c0_11] : memref<8x128xf32, #tpu.memory_space<vmem>>, vector<8x128xf32>
      tpu.vector_store %arg5[%c0_10, %c0_11], %23 {strides = array<i32>} : memref<8x128xf32, #tpu.memory_space<vmem>>, vector<8x128xf32>,
    } else {
    }
    %c0 = arith.constant 0 : index
    %c0_1 = arith.constant 0 : index
    %3 = vector.load %arg2[%c0, %c0_1] : memref<16x8xf32, #tpu.memory_space<vmem>>, vector<16x8xf32>
    %c0_2 = arith.constant 0 : index
    %c0_3 = arith.constant 0 : index
    %4 = vector.load %arg5[%c0_2, %c0_3] : memref<8x128xf32, #tpu.memory_space<vmem>>, vector<8x128xf32>
    %cst = arith.constant dense<0.000000e+00> : vector<16x128xf32>
    %5 = tpu.matmul %3, %4, %cst {dimension_numbers = #tpu.dot_dimension_numbers<[1], [0], [0], [1], [0, 0, 1, 1], [], []>} : vector<16x8xf32>, vector<8x128xf32>, vector<16x128xf32> -> vector<16x128xf32>
    %c0_4 = arith.constant 0 : index
    %c0_5 = arith.constant 0 : index
    %6 = vector.load %arg4[%c0_4, %c0_5] : memref<16x128xf32, #tpu.memory_space<vmem>>, vector<16x128xf32>
    tpu.vector_store %arg4[%c0_4, %c0_5], %5 {strides = array<i32>} : memref<16x128xf32, #tpu.memory_space<vmem>>, vector<16x128xf32>,
    return
  }
  func.func @transform_0(%arg0: i32, %arg1: i32) -> (i32, i32) {
    %c0_i32 = arith.constant 0 : i32
    %c0_i32_0 = arith.constant 0 : i32
    return %arg1, %c0_i32 : i32, i32
  }
  func.func @transform_1(%arg0: i32, %arg1: i32) -> (i32, i32) {
    %c0_i32 = arith.constant 0 : i32
    %c0_i32_0 = arith.constant 0 : i32
    return %c0_i32, %arg0 : i32, i32
  }
  func.func @transform_2(%arg0: i32, %arg1: i32) -> (i32, i32) {
    %c0_i32 = arith.constant 0 : i32
    return %arg1, %arg0 : i32, i32
  }
}

</mosaic_0001>

<llo_original>
// kernel: tpu_custom_call.1
$region0: #{tpu_custom_call.1}
  #allocation0 [shape = 'u32[]', space=smem, size = 0x4, offset = 0x4, fixed_abs, tag = 'smem constant byte address 0x4 - core index']
  #allocation1 [shape = 'u32[144,128]{1,0:T(1,128)}', space=vmem, size = 0x12000, scoped, tag = 'internal scratch']
  #allocation2 [shape = 'f32[8,128]{1,0:T(8,128)}', space=vmem, size = 0x1000, scoped, tag = 'scratch operand']
  %s0 = inlined_call_operand.vmem [shape: f32[16,8], index: 0, kind: input, shape index: {}]
  %s1 = inlined_call_operand.vmem [shape: f32[8,128], index: 1, kind: input, shape index: {}]
  %s2 = inlined_call_operand.hbm [shape: f32[16,128], index: 2, kind: output, shape index: {}]
  %s3 = sld [smem:[#allocation0]]
  $region22: #{tpu_custom_call.1} parent=0
    _
  %s5 = ssub.s32 1, %s3
  %s6 = scalar_select 0, %s5, %s3
  $region1: #{tpu_custom_call.1} parent=0
    #allocation3 [shape = 'u8[8192]{0}', space=vmem, size = 0x2000, scoped, tag = 'output window, operand 0, single buffered']
    #allocation4 [shape = 's32[1]{0}', space=sflag, size = 0x4, scoped, tag = 'scoped memory for tpu_custom_call.1']
    %7 = vsyncpa [#allocation4], 0
    // Predicated region
    $region2: #{tpu_custom_call.1} parent=1 // pred_check
      _
    $region3: #{tpu_custom_call.1} parent=1 // pred_check_branch
      %9 = sbr.rel (0) target = $region5
    $region4: #{tpu_custom_call.1} parent=1 // pred_region
      _
    $region5: #{tpu_custom_call.1} parent=1 // pred_fallthru
      _
    // Predicated region
    $region6: #{tpu_custom_call.1} parent=1 // pred_check
      _
    $region7: #{tpu_custom_call.1} parent=1 // pred_check_branch
      %11 = sbr.rel (0) target = $region9
    $region8: #{tpu_custom_call.1} parent=1 // pred_region
      _
    $region9: #{tpu_custom_call.1} parent=1 // pred_fallthru
      _
    %p12 = scmp.eq.s32.totalorder 0, 0
    // Predicated region
    $region10: #{tpu_custom_call.1} parent=1 // pred_check
      %p13 = pneg %p12
    $region11: #{tpu_custom_call.1} parent=1 // pred_check_branch
      %15 = sbr.rel (%p13) target = $region13
    $region12: #{tpu_custom_call.1} parent=1 // pred_region
      %v16 = vlaneseq
      %v17 = vshrl.u32 %v16, 7
      %v18 = vlaneseq
      %v19 = vand.u32 %v18, 127
      %s20 = smul.u32 0, 128
      %v21 = vstv %s20
      %v22 = vadd.s32 %v19, %v21
      %v23 = vmul.u32 %v17, 32
      %v24 = vmul.u32 %v22, 7
      %vm25 = vcmp.le.s32.totalorder %v23, %v24
      %vm26 = vcmp.lt.s32.totalorder %v22, 32
      %vm27 = vmand %vm25, %vm26
      %v28 = vld [vmem:[%s1] sm:$0xff]
      %v29 = vsel %vm27, %v28, 0.0
      %30 = vst [vmem:[#allocation2] sm:$0xff] %v29
    $region13: #{tpu_custom_call.1} parent=1 // pred_fallthru
      _
    %v31 = vld [vmem:[%s0] sm:$0xff]
    %v32 = vld [vmem:[%s0 + $0x8] sm:$0xff]
    %v33 = vld [vmem:[#allocation2] sm:$0xff]
    %vm34 = vcmask 64512
    %v36 = vsel %vm34, %v31, 0
    %v39 = vsel %vm34, %v32, 0
    %41 = vmatprep.subr.mxu0 0.0
    %42 = vmatpush1.msra.mxu0 %v33
    %43 = vmatprep.subr.mxu0 0.0
    %44 = vmatpush1.msra.mxu0 0.0
    %45 = vmatprep.subr.mxu0 0.0
    %46 = vmatpush1.msra.mxu0 0.0
    %47 = vmatprep.subr.mxu0 0.0
    %48 = vmatpush1.msra.mxu0 0.0
    %49 = vmatprep.subr.mxu0 0.0
    %50 = vmatpush1.msra.mxu0 0.0
    %51 = vmatprep.subr.mxu0 0.0
    %52 = vmatpush1.msra.mxu0 0.0
    %53 = vmatprep.subr.mxu0 0.0
    %54 = vmatpush1.msra.mxu0 0.0
    %55 = vmatprep.subr.mxu0 0.0
    %56 = vmatpush1.msra.mxu0 0.0
    %57 = vmatprep.subr.mxu0 0.0
    %58 = vmatpush1.msra.mxu0 0.0
    %59 = vmatprep.subr.mxu0 0.0
    %60 = vmatpush1.msra.mxu0 0.0
    %61 = vmatprep.subr.mxu0 0.0
    %62 = vmatpush1.msra.mxu0 0.0
    %63 = vmatprep.subr.mxu0 0.0
    %64 = vmatpush1.msra.mxu0 0.0
    %65 = vmatprep.subr.mxu0 0.0
    %66 = vmatpush1.msra.mxu0 0.0
    %67 = vmatprep.subr.mxu0 0.0
    %68 = vmatpush1.msra.mxu0 0.0
    %69 = vmatprep.subr.mxu0 0.0
    %70 = vmatpush1.msra.mxu0 0.0
    %71 = vmatprep.subr.mxu0 0.0
    %72 = vmatpush1.msra.mxu0 0.0
    %73 = vmatprep.subr.mxu0 0.0
    %74 = vmatpush1.msra.mxu0 0.0
    %75 = vmatprep.subr.mxu0 0.0
    %76 = vmatpush1.msra.mxu0 0.0
    %77 = vmatprep.subr.mxu0 0.0
    %78 = vmatpush1.msra.mxu0 0.0
    %79 = vmatprep.subr.mxu0 0.0
    %80 = vmatpush1.msra.mxu0 0.0
    %81 = vmatprep.subr.mxu0 0.0
    %82 = vmatpush1.msra.mxu0 0.0
    %83 = vmatprep.subr.mxu0 0.0
    %84 = vmatpush1.msra.mxu0 0.0
    %85 = vmatprep.subr.mxu0 0.0
    %86 = vmatpush1.msra.mxu0 0.0
    %87 = vmatprep.subr.mxu0 0.0
    %88 = vmatpush1.msra.mxu0 0.0
    %89 = vmatprep.subr.mxu0 0.0
    %90 = vmatpush1.msra.mxu0 0.0
    %91 = vmatprep.subr.mxu0 0.0
    %92 = vmatpush1.msra.mxu0 0.0
    %93 = vmatprep.subr.mxu0 0.0
    %94 = vmatpush1.msra.mxu0 0.0
    %95 = vmatprep.subr.mxu0 0.0
    %96 = vmatpush1.msra.mxu0 0.0
    %97 = vmatprep.subr.mxu0 0.0
    %98 = vmatpush1.msra.mxu0 0.0
    %99 = vmatprep.subr.mxu0 0.0
    %100 = vmatpush1.msra.mxu0 0.0
    %101 = vmatprep.subr.mxu0 0.0
    %102 = vmatpush1.msra.mxu0 0.0
    %103 = vmatprep.subr.mxu0 0.0
    %104 = vmatpush1.msra.mxu0 0.0
    %105 = vmatprep.mubr.f32.mxu0 0.0
    %106 = vmatmul.mubr.f32.gmra.mrb[0].mxu0 %v36
    %v107 = vpop.f32.mrb[0].mxu0
    %v108 = vadd.f32 0.0, %v107
    %v109 = vpop.f32.mrb[0].mxu0
    %110 = vmatprep.mubr.f32.mxu0 0.0
    %111 = vmatmul.mubr.f32.gmra.mrb[0].mxu0 %v39
    %v112 = vpop.f32.mrb[0].mxu0
    %v113 = vadd.f32 0.0, %v112
    %v114 = vpop.f32.mrb[0].mxu0
    %115 = vdwg.mxu0
    %116 = vst [vmem:[#allocation3] sm:$0xff] %v108
    %117 = vst [vmem:[#allocation3 + $0x8] sm:$0xff] %v113
    // Predicated region
    $region14: #{tpu_custom_call.1} parent=1 // pred_check
      _
    $region15: #{tpu_custom_call.1} parent=1 // pred_check_branch
      %119 = sbr.rel (0) target = $region17
    $region16: #{tpu_custom_call.1} parent=1 // pred_region
      %s121 = ssub.s32 256, 256
      %122 = vsyncadd [#allocation4], %s121
      %s123 = sshll.u32 [#allocation3], 4
      %s124 = int_to_ptr.vmem [resolvable:$true] %s123
      %129 = dma.vmem_to_hbm [thread:$0]  %s124, 256, %s2, [#allocation4], 128, 128, 8
    $region17: #{tpu_custom_call.1} parent=1 // pred_fallthru
      _
    // Predicated region
    $region18: #{tpu_custom_call.1} parent=1 // pred_check
      _
    $region19: #{tpu_custom_call.1} parent=1 // pred_check_branch
      %131 = sbr.rel (0) target = $region21
    $region20: #{tpu_custom_call.1} parent=1 // pred_region
      %132 = dma.done [#allocation4], 256
    $region21: #{tpu_custom_call.1} parent=1 // pred_fallthru
      _
    %133 = vsyncpa [#allocation4], 1

</llo_original>
